<compile_context>
chip_gen: v7x
topology: tpu7x:2x2x1
jax: 0.10.0
libtpu: 0.0.40
codegen_flags: <defaults>
</compile_context>

<pallas_src>
import functools
import math
from typing import NamedTuple

import jax
import jax.numpy as jnp
from jax.experimental import pallas as pl
from jax.experimental.pallas import tpu as pltpu

LANE = 128


def _round_up(x, m):
    return (x + m - 1) // m * m


def _choose_tile(n):
    """Row tile: minimal padding at small n, >=2 grid steps (v7x dual-TC) and
    <=1024-row tiles (>=85% of HBM roofline per measurements) at large n."""
    n = max(n, 1)
    if n <= 256:
        return _round_up(n, 8)                 # one sublane-aligned step
    steps = max(2, pl.cdiv(n, 1024))           # >=2 steps so both v7x TCs get work
    return _round_up(pl.cdiv(n, steps), LANE)  # multiple of 128


def _fused_embed_kernel(ids_ref, tab_ref, out_ref):
    # ids_ref: (T, 3) int32 — up to three row indices into the fused table per
    #          output row (unused slots are set to vocab_pad and match nothing).
    # tab_ref: (VP, DP)     — fused pre-projected table (Linear F, bias and
    #          sqrt(d_model) already folded in), resident in VMEM, bf16.
    # out_ref: (T, DP) f32  — lane-dense rows, ONE unmasked store.
    ids = ids_ref[...]
    t = ids.shape[0]
    vp = tab_ref.shape[0]
    iota = jax.lax.broadcasted_iota(jnp.int32, (t, vp), 1)
    hot = ((iota == ids[:, 0:1]) |
           (iota == ids[:, 1:2]) |
           (iota == ids[:, 2:3]))
    hot = hot.astype(tab_ref.dtype)            # 0/1: exact in bf16
    # Single multi-hot MXU matmul, K = vocab_pad (=128 here), f32 accumulate,
    # single-pass bf16 operands (no Precision.HIGHEST multi-pass).
    out_ref[...] = jnp.dot(hot, tab_ref[...],
                           preferred_element_type=jnp.float32
                           ).astype(out_ref.dtype)


class EmbeddingMeta(NamedTuple):
    d_model: int
    dp: int
    vocab_pad: int
    task_base: int
    uni_base: int
    bi1_base: int
    bi2_base: int


def prepare_embedding_params(task_w, uni_w, bi_w, lin_w, lin_b,
                             compute_dtype=jnp.bfloat16):
    """One-time prep: fold Linear F + bias + sqrt(d_model) into a single stacked,
    pre-projected, lane-padded table (f32 HIGHEST math, then cast to compute_dtype)."""
    hp = jax.lax.Precision.HIGHEST
    task_size, d_model = task_w.shape
    word_size, uni_dim = uni_w.shape
    bi_size, bi_dim = bi_w.shape
    scale = math.sqrt(d_model)

    w = lin_w.astype(jnp.float32)              # (d_model, embed_dim)
    w_uni = w[:, :uni_dim].T
    w_bi1 = w[:, uni_dim:uni_dim + bi_dim].T
    w_bi2 = w[:, uni_dim + bi_dim:uni_dim + 2 * bi_dim].T
    b = lin_b.astype(jnp.float32)

    # (onehot @ Tab) @ W == onehot @ (Tab @ W): pre-project every vocab row.
    proj_task = task_w.astype(jnp.float32) * scale
    proj_uni = (jnp.dot(uni_w.astype(jnp.float32), w_uni, precision=hp) + b) * scale
    proj_bi1 = jnp.dot(bi_w.astype(jnp.float32), w_bi1, precision=hp) * scale
    proj_bi2 = jnp.dot(bi_w.astype(jnp.float32), w_bi2, precision=hp) * scale

    total = task_size + word_size + 2 * bi_size
    vocab_pad = _round_up(total, LANE)
    dp = d_model if d_model % LANE == 0 else _round_up(d_model, LANE)

    stacked = jnp.concatenate([proj_task, proj_uni, proj_bi1, proj_bi2], axis=0)
    tab = jnp.zeros((vocab_pad, dp), jnp.float32)
    tab = tab.at[:total, :d_model].set(stacked)
    tab = tab.astype(compute_dtype)

    meta = EmbeddingMeta(
        d_model=d_model, dp=dp, vocab_pad=vocab_pad,
        task_base=0,
        uni_base=task_size,
        bi1_base=task_size + word_size,
        bi2_base=task_size + word_size + bi_size)
    return tab, meta


@functools.partial(jax.jit, static_argnums=1)
def embedding_forward(proj_tab, meta: EmbeddingMeta, task, uni, bi1, bi2):
    """task: (B, >=1) int32, uni: (B, S) int32, bi1/bi2: (B, S-1) int32
       -> (B, S, d_model) float32."""
    d_model, dp, vp = meta.d_model, meta.dp, meta.vocab_pad
    b, s = uni.shape
    n = b * s
    tile = _choose_tile(n)
    n_pad = _round_up(n, tile)
    grid = (n_pad // tile,)

    # Per-(b, s) row ids into the fused table:
    #   s == 0 : [task_base + task_id,  INVALID,            INVALID          ]
    #   s >  0 : [uni_base + uni[:,s],  bi1_base + bi1[s-1], bi2_base + bi2[s-1]]
    # INVALID = vocab_pad is outside the iota range, so it contributes nothing.
    inval_col = jnp.full((b, 1), vp, jnp.int32)
    id0 = jnp.concatenate([meta.task_base + task[:, 0:1].astype(jnp.int32),
                           meta.uni_base + uni[:, 1:].astype(jnp.int32)], axis=1)
    id1 = jnp.concatenate([inval_col, meta.bi1_base + bi1.astype(jnp.int32)], axis=1)
    id2 = jnp.concatenate([inval_col, meta.bi2_base + bi2.astype(jnp.int32)], axis=1)
    ids = jnp.stack([id0.reshape(-1), id1.reshape(-1), id2.reshape(-1)], axis=-1)
    if n_pad > n:
        ids = jnp.pad(ids, ((0, n_pad - n), (0, 0)), constant_values=vp)

    cost = pl.CostEstimate(
        flops=2 * n_pad * vp * dp,
        transcendentals=0,
        bytes_accessed=(n_pad * 3 * 4
                        + proj_tab.size * proj_tab.dtype.itemsize
                        + n_pad * dp * 4))

    rows = pl.pallas_call(
        _fused_embed_kernel,
        out_shape=jax.ShapeDtypeStruct((n_pad, dp), jnp.float32),
        grid_spec=pltpu.PrefetchScalarGridSpec(
            num_scalar_prefetch=0,
            grid=grid,
            in_specs=[
                pl.BlockSpec((tile, 3), lambda r: (r, 0)),   # row-tile of ids
                pl.BlockSpec((vp, dp), lambda r: (0, 0)),    # fused table, invariant
            ],
            out_specs=pl.BlockSpec((tile, dp), lambda r: (r, 0)),
        ),
        compiler_params=pltpu.CompilerParams(
            dimension_semantics=("parallel",)),   # row tiles shard across v7x's 2 TCs
        cost_estimate=cost,
    )(ids, proj_tab)

    out = rows
    if n_pad > n:
        out = out[:n]
    if dp > d_model:          # disappears entirely when d_model % 128 == 0
        out = out[:, :d_model]
    return out.reshape(b, s, d_model)


if __name__ == "__main__":
    # ---- sizes (small, consistent with the module) ----
    B, S = 2, 8
    task_size, d_model = 4, 32
    word_size, uni_dim = 50, 16
    bi_size, bi_dim = 30, 12
    embed_dim = uni_dim + 2 * bi_dim          # 40 != d_model -> Linear F present

    key = jax.random.PRNGKey(0)
    k = jax.random.split(key, 8)

    # ---- deterministic parameters (synthetic, like nn.Module __init__) ----
    task_w = jax.random.normal(k[0], (task_size, d_model), jnp.float32) * 0.02
    uni_w = jax.random.normal(k[1], (word_size, uni_dim), jnp.float32) * 0.02
    bi_w = jax.random.normal(k[2], (bi_size, bi_dim), jnp.float32) * 0.02
    # nn.Linear(embed_dim, d_model): weight (d_model, embed_dim), bias (d_model,)
    lin_w = jax.random.normal(k[3], (d_model, embed_dim), jnp.float32) * 0.05
    lin_b = jax.random.normal(k[4], (d_model,), jnp.float32) * 0.05

    # ---- deterministic integer inputs ----
    task = jax.random.randint(k[5], (B, 2), 0, task_size, jnp.int32)
    uni = jax.random.randint(k[6], (B, S), 0, word_size, jnp.int32)
    kk = jax.random.split(k[7], 2)
    bi1 = jax.random.randint(kk[0], (B, S - 1), 0, bi_size, jnp.int32)
    bi2 = jax.random.randint(kk[1], (B, S - 1), 0, bi_size, jnp.int32)

    # ---- one-time parameter prep (Tab@W fusion, bias/scale fold, bf16 cast) ----
    proj_tab, meta = prepare_embedding_params(task_w, uni_w, bi_w, lin_w, lin_b,
                                              compute_dtype=jnp.bfloat16)

    # ---- Pallas kernel: whole forward as one fused multi-hot matmul ----
    out = embedding_forward(proj_tab, meta, task, uni, bi1, bi2)
    out = jax.block_until_ready(out)

    # ---- reference #2: same folded (bf16-rounded) table gathered in plain JAX:
    #      checks the kernel's gather/matmul exactly (tight tolerance) ----
    tab_f32 = proj_tab.astype(jnp.float32)
    rows_task = jnp.take(tab_f32, meta.task_base + task[:, 0:1], axis=0)
    rows_uni = jnp.take(tab_f32, meta.uni_base + uni[:, 1:], axis=0)
    rows_bi1 = jnp.take(tab_f32, meta.bi1_base + bi1, axis=0)
    rows_bi2 = jnp.take(tab_f32, meta.bi2_base + bi2, axis=0)
    ref_kernel = jnp.concatenate([rows_task, rows_uni + rows_bi1 + rows_bi2],
                                 axis=1)[:, :, :d_model]

    # ---- reference #1: exact PyTorch forward semantics in f32 (looser tolerance
    #      only accounts for the bf16 rounding of the folded table) ----
    hp = jax.lax.Precision.HIGHEST
    y_feat = jnp.concatenate([jnp.take(uni_w, uni[:, 1:], axis=0),
                              jnp.take(bi_w, bi1, axis=0),
                              jnp.take(bi_w, bi2, axis=0)], axis=-1)
    ref_torch = jnp.concatenate(
        [jnp.take(task_w, task[:, 0:1], axis=0),
         jnp.einsum("bse,de->bsd", y_feat, lin_w, precision=hp) + lin_b],
        axis=1) * math.sqrt(d_model)

    assert out.shape == (B, S, d_model)
    assert jnp.allclose(out, ref_kernel, atol=1e-5, rtol=1e-5), \
        "kernel gather/matmul mismatch"
    assert jnp.allclose(out, ref_torch, atol=5e-3, rtol=5e-3), \
        "mismatch vs PyTorch-semantics reference"

    print("KERNEL_OK")
</pallas_src>

<mosaic_0001>
module attributes {stable_mosaic.version = 11 : i64} {
  func.func @_fused_embed_kernel(%arg0: i32, %arg1: memref<16x3xi32, #tpu.memory_space<vmem>>, %arg2: memref<128x128xbf16, #tpu.memory_space<vmem>>, %arg3: memref<16x128xf32, #tpu.memory_space<vmem>>) attributes {dimension_semantics = [#tpu.dimension_semantics<parallel>], iteration_bounds = array<i64: 1>, scalar_prefetch = 0 : i64, scratch_operands = 0 : i64, tpu.core_type = #tpu.core_type<tc>, window_params = [{transform_indices = @transform_0, window_bounds = array<i64: 16, 3>}, {pipeline_mode = #tpu.pipeline_mode<synchronous>, transform_indices = @transform_1, window_bounds = array<i64: 128, 128>}, {transform_indices = @transform_2, window_bounds = array<i64: 16, 128>}]} {
    %c0 = arith.constant 0 : index
    %c0_0 = arith.constant 0 : index
    %0 = vector.load %arg1[%c0, %c0_0] : memref<16x3xi32, #tpu.memory_space<vmem>>, vector<16x3xi32>
    %1 = tpu.iota {dimensions = array<i32: 1>} : vector<16x128xi32>
    %2 = vector.extract_strided_slice %0 {offsets = [0, 0], sizes = [16, 1], strides = [1, 1]} : vector<16x3xi32> to vector<16x1xi32>
    %3 = vector.broadcast %2 : vector<16x1xi32> to vector<16x128xi32>
    %4 = arith.cmpi eq, %1, %3 : vector<16x128xi32>
    %5 = vector.extract_strided_slice %0 {offsets = [0, 1], sizes = [16, 1], strides = [1, 1]} : vector<16x3xi32> to vector<16x1xi32>
    %6 = vector.broadcast %5 : vector<16x1xi32> to vector<16x128xi32>
    %7 = arith.cmpi eq, %1, %6 : vector<16x128xi32>
    %8 = arith.ori %4, %7 : vector<16x128xi1>
    %9 = vector.extract_strided_slice %0 {offsets = [0, 2], sizes = [16, 1], strides = [1, 1]} : vector<16x3xi32> to vector<16x1xi32>
    %10 = vector.broadcast %9 : vector<16x1xi32> to vector<16x128xi32>
    %11 = arith.cmpi eq, %1, %10 : vector<16x128xi32>
    %12 = arith.ori %8, %11 : vector<16x128xi1>
    %13 = arith.extui %12 : vector<16x128xi1> to vector<16x128xi32>
    %14 = arith.sitofp %13 : vector<16x128xi32> to vector<16x128xf32>
    %15 = arith.truncf %14 : vector<16x128xf32> to vector<16x128xbf16>
    %c0_1 = arith.constant 0 : index
    %c0_2 = arith.constant 0 : index
    %16 = vector.load %arg2[%c0_1, %c0_2] : memref<128x128xbf16, #tpu.memory_space<vmem>>, vector<128x128xbf16>
    %cst = arith.constant dense<0.000000e+00> : vector<16x128xf32>
    %17 = tpu.matmul %15, %16, %cst {dimension_numbers = #tpu.dot_dimension_numbers<[1], [0], [0], [1], [0, 0, 1, 1], [], []>} : vector<16x128xbf16>, vector<128x128xbf16>, vector<16x128xf32> -> vector<16x128xf32>
    %c0_3 = arith.constant 0 : index
    %c0_4 = arith.constant 0 : index
    %18 = vector.load %arg3[%c0_3, %c0_4] : memref<16x128xf32, #tpu.memory_space<vmem>>, vector<16x128xf32>
    tpu.vector_store %arg3[%c0_3, %c0_4], %17 {strides = array<i32>} : memref<16x128xf32, #tpu.memory_space<vmem>>, vector<16x128xf32>,
    return
  }
  func.func @transform_0(%arg0: i32) -> (i32, i32) {
    %c0_i32 = arith.constant 0 : i32
    %c0_i32_0 = arith.constant 0 : i32
    return %arg0, %c0_i32 : i32, i32
  }
  func.func @transform_1(%arg0: i32) -> (i32, i32) {
    %c0_i32 = arith.constant 0 : i32
    %c0_i32_0 = arith.constant 0 : i32
    %c0_i32_1 = arith.constant 0 : i32
    return %c0_i32, %c0_i32_0 : i32, i32
  }
  func.func @transform_2(%arg0: i32) -> (i32, i32) {
    %c0_i32 = arith.constant 0 : i32
    %c0_i32_0 = arith.constant 0 : i32
    return %arg0, %c0_i32 : i32, i32
  }
}

</mosaic_0001>

<llo_original>
// kernel: embedding_forward.1
$region0: #{embedding_forward.1}
  #allocation0 [shape = 'u32[]', space=smem, size = 0x4, offset = 0x4, fixed_abs, tag = 'smem constant byte address 0x4 - core index']
  #allocation1 [shape = 'u32[144,128]{1,0:T(1,128)}', space=vmem, size = 0x12000, scoped, tag = 'internal scratch']
  %s0 = inlined_call_operand.vmem [shape: s32[16,3], index: 0, kind: input, shape index: {}]
  %s1 = inlined_call_operand.vmem [shape: bf16[128,128], index: 1, kind: input, shape index: {}]
  %s2 = inlined_call_operand.vmem [shape: f32[16,128], index: 2, kind: output, shape index: {}]
  %s3 = sld [smem:[#allocation0]]
  $region18: #{embedding_forward.1} parent=0
    _
  %s5 = ssub.s32 1, %s3
  %s6 = scalar_select 0, %s5, %s3
  // Predicated region
  $region2: #{embedding_forward.1} parent=0 // pred_check
    _
  $region3: #{embedding_forward.1} parent=0 // pred_check_branch
    %8 = sbr.rel (0) target = $region5
  $region4: #{embedding_forward.1} parent=0 // pred_region
    _
  $region5: #{embedding_forward.1} parent=0 // pred_fallthru
    _
  // Predicated region
  $region6: #{embedding_forward.1} parent=0 // pred_check
    _
  $region7: #{embedding_forward.1} parent=0 // pred_check_branch
    %10 = sbr.rel (0) target = $region9
  $region8: #{embedding_forward.1} parent=0 // pred_region
    _
  $region9: #{embedding_forward.1} parent=0 // pred_fallthru
    _
  %v12 = vld [vmem:[%s0] sm:$0xff]
  %v13 = vld [vmem:[%s0 + $0x8] sm:$0xff]
  %v14 = vlaneseq
  %v15 = vand.u32 %v14, 127
  %16 = vset.pattern.permute.xlu0 0
  %17 = vperm.xlu0 %16, %v12
  %v18 = vpop.permute.xlu0 %17
  %19 = vset.pattern.permute.xlu0 0
  %20 = vperm.xlu0 %19, %v13
  %v21 = vpop.permute.xlu0 %20
  %vm22 = vcmp.eq.s32.totalorder %v15, %v18
  %vm23 = vcmp.eq.s32.totalorder %v15, %v21
  %24 = vset.pattern.permute.xlu0 1
  %25 = vperm.xlu0 %24, %v12
  %v26 = vpop.permute.xlu0 %25
  %27 = vset.pattern.permute.xlu0 1
  %28 = vperm.xlu0 %27, %v13
  %v29 = vpop.permute.xlu0 %28
  %vm30 = vcmp.eq.s32.totalorder %v15, %v26
  %vm31 = vcmp.eq.s32.totalorder %v15, %v29
  %vm32 = vmor %vm22, %vm30
  %vm33 = vmor %vm23, %vm31
  %34 = vset.pattern.permute.xlu0 2
  %35 = vperm.xlu0 %34, %v12
  %v36 = vpop.permute.xlu0 %35
  %37 = vset.pattern.permute.xlu0 2
  %38 = vperm.xlu0 %37, %v13
  %v39 = vpop.permute.xlu0 %38
  %vm40 = vcmp.eq.s32.totalorder %v15, %v36
  %vm41 = vcmp.eq.s32.totalorder %v15, %v39
  %vm42 = vmor %vm32, %vm40
  %vm43 = vmor %vm33, %vm41
  %v44 = vsel %vm42, 1, 0
  %v45 = vsel %vm43, 1, 0
  %v46 = vcvt.s32.f32 %v44
  %v47 = vcvt.s32.f32 %v45
  %v48 = vpack.c.bf16 %v47, %v46
  %v49 = vld [vmem:[%s1] sm:$0xf]
  %v50 = vld [vmem:[%s1 + $0x4] sm:$0xf]
  %v51 = vld [vmem:[%s1 + $0x8] sm:$0xf]
  %v52 = vld [vmem:[%s1 + $0xc] sm:$0xf]
  %v53 = vld [vmem:[%s1 + $0x10] sm:$0xf]
  %v54 = vld [vmem:[%s1 + $0x14] sm:$0xf]
  %v55 = vld [vmem:[%s1 + $0x18] sm:$0xf]
  %v56 = vld [vmem:[%s1 + $0x1c] sm:$0xf]
  %v57 = vld [vmem:[%s1 + $0x20] sm:$0xf]
  %v58 = vld [vmem:[%s1 + $0x24] sm:$0xf]
  %v59 = vld [vmem:[%s1 + $0x28] sm:$0xf]
  %v60 = vld [vmem:[%s1 + $0x2c] sm:$0xf]
  %v61 = vld [vmem:[%s1 + $0x30] sm:$0xf]
  %v62 = vld [vmem:[%s1 + $0x34] sm:$0xf]
  %v63 = vld [vmem:[%s1 + $0x38] sm:$0xf]
  %v64 = vld [vmem:[%s1 + $0x3c] sm:$0xf]
  %v81 = vunpack.c.l.b16 %v49
  %v82 = vunpack.c.l.b16 %v50
  %v83 = vunpack.c.l.b16 %v51
  %v84 = vunpack.c.l.b16 %v52
  %v85 = vunpack.c.l.b16 %v53
  %v86 = vunpack.c.l.b16 %v54
  %v87 = vunpack.c.l.b16 %v55
  %v88 = vunpack.c.l.b16 %v56
  %v89 = vunpack.c.l.b16 %v57
  %v90 = vunpack.c.l.b16 %v58
  %v91 = vunpack.c.l.b16 %v59
  %v92 = vunpack.c.l.b16 %v60
  %v93 = vunpack.c.l.b16 %v61
  %v94 = vunpack.c.l.b16 %v62
  %v95 = vunpack.c.l.b16 %v63
  %v96 = vunpack.c.l.b16 %v64
  %v97 = vpack.c.b16 %v82, %v81
  %v98 = vpack.c.b16 %v84, %v83
  %v99 = vpack.c.b16 %v86, %v85
  %v100 = vpack.c.b16 %v88, %v87
  %v101 = vpack.c.b16 %v90, %v89
  %v102 = vpack.c.b16 %v92, %v91
  %v103 = vpack.c.b16 %v94, %v93
  %v104 = vpack.c.b16 %v96, %v95
  %113 = vmatprep.subr.bf16.mxu0 0
  %114 = vmatpush1.bf16.msra.mxu0 %v97
  %115 = vmatprep.subr.bf16.mxu0 0
  %116 = vmatpush1.bf16.msra.mxu0 %v98
  %117 = vmatprep.subr.bf16.mxu0 0
  %118 = vmatpush1.bf16.msra.mxu0 %v99
  %119 = vmatprep.subr.bf16.mxu0 0
  %120 = vmatpush1.bf16.msra.mxu0 %v100
  %121 = vmatprep.subr.bf16.mxu0 0
  %122 = vmatpush1.bf16.msra.mxu0 %v101
  %123 = vmatprep.subr.bf16.mxu0 0
  %124 = vmatpush1.bf16.msra.mxu0 %v102
  %125 = vmatprep.subr.bf16.mxu0 0
  %126 = vmatpush1.bf16.msra.mxu0 %v103
  %127 = vmatprep.subr.bf16.mxu0 0
  %128 = vmatpush1.bf16.msra.mxu0 %v104
  %129 = vmatprep.subr.bf16.mxu0 0
  %130 = vmatpush1.bf16.msra.mxu0 0
  %131 = vmatprep.subr.bf16.mxu0 0
  %132 = vmatpush1.bf16.msra.mxu0 0
  %133 = vmatprep.subr.bf16.mxu0 0
  %134 = vmatpush1.bf16.msra.mxu0 0
  %135 = vmatprep.subr.bf16.mxu0 0
  %136 = vmatpush1.bf16.msra.mxu0 0
  %137 = vmatprep.subr.bf16.mxu0 0
  %138 = vmatpush1.bf16.msra.mxu0 0
  %139 = vmatprep.subr.bf16.mxu0 0
  %140 = vmatpush1.bf16.msra.mxu0 0
  %141 = vmatprep.subr.bf16.mxu0 0
  %142 = vmatpush1.bf16.msra.mxu0 0
  %143 = vmatprep.subr.bf16.mxu0 0
  %144 = vmatpush1.bf16.msra.mxu0 0
  %145 = vmatprep.mubr.bf16.mxu0 0
  %146 = vmatmul.mubr.bf16.gmra.mrb[0].mxu0 %v48
  %v147 = vpop.f32.mrb[0].mxu0
  %v148 = vadd.f32 0.0, %v147
  %v149 = vpop.f32.mrb[0].mxu0
  %v150 = vpop.f32.mrb[0].mxu0
  %v151 = vadd.f32 0.0, %v150
  %v152 = vpop.f32.mrb[0].mxu0
  %153 = vdwg.mxu0
  %154 = vst [vmem:[%s2] sm:$0xff] %v148
  %155 = vst [vmem:[%s2 + $0x8] sm:$0xff] %v151
  // Predicated region
  $region10: #{embedding_forward.1} parent=0 // pred_check
    _
  $region11: #{embedding_forward.1} parent=0 // pred_check_branch
    %157 = sbr.rel (0) target = $region13
  $region12: #{embedding_forward.1} parent=0 // pred_region
    _
  $region13: #{embedding_forward.1} parent=0 // pred_fallthru
    _
  // Predicated region
  $region14: #{embedding_forward.1} parent=0 // pred_check
    _
  $region15: #{embedding_forward.1} parent=0 // pred_check_branch
    %159 = sbr.rel (0) target = $region17
  $region16: #{embedding_forward.1} parent=0 // pred_region
    _
  $region17: #{embedding_forward.1} parent=0 // pred_fallthru
    _

</llo_original>
